<compile_context>
chip_gen: v7x
topology: tpu7x:2x2x1
jax: 0.10.0
libtpu: 0.0.40
codegen_flags: <defaults>
</compile_context>

<pallas_src>
import functools

import jax
import jax.numpy as jnp
from jax.experimental import pallas as pl
from jax.experimental.pallas import tpu as pltpu

_LANES = 128


def _min_sublanes(dtype):
    # Minimum second-minor tile: f32 -> 8, bf16/f16 -> 16, int8/fp8 -> 32.
    return max(8, 8 * (4 // jnp.dtype(dtype).itemsize))


@functools.lru_cache(maxsize=1)
def _hw_config():
    """Returns (target (a+b+out) bytes per grid step, vmem_limit_bytes).

    Generation-aware: blocks are double-buffered (2x per array), so the
    resident VMEM footprint is ~2x the per-step byte target.
    """
    vmem_cap = None
    try:
        info = pltpu.get_tpu_info()
        for name in ("vmem_capacity_bytes", "vmem_size_bytes", "vmem_bytes"):
            vmem_cap = getattr(info, name, None)
            if vmem_cap:
                break
    except Exception:
        vmem_cap = None

    if vmem_cap is not None and int(vmem_cap) >= 96 * 1024 * 1024:
        # v5e / v6e class (128 MiB physical VMEM): big steps, raised limit.
        return 24 * 1024 * 1024, 96 * 1024 * 1024
    # v7x class (64 MiB physical VMEM) or unknown: conservative but still
    # large enough to amortise per-step overhead against 3.2 TB/s HBM.
    return 14 * 1024 * 1024, 48 * 1024 * 1024


def _pick_col_tile(h, max_cols=8192):
    """Largest multiple of 128 that divides h (capped); None if h % 128 != 0."""
    if h % _LANES != 0:
        return None
    cap = (min(max_cols, h) // _LANES) * _LANES
    for c in range(cap, 0, -_LANES):
        if h % c == 0:
            return c
    return _LANES  # unreachable when h % 128 == 0


def _min_total_steps(total_out_bytes):
    """>=2 (prefer >=4) grid steps for sizable tensors so both v7x TCs work."""
    if total_out_bytes >= 8 * 1024 * 1024:
        return 4
    if total_out_bytes >= 2 * 1024 * 1024:
        return 2
    return 1


def _pick_tile_rows(num_rows, bytes_per_row, dtype, target_block_bytes,
                    n_col_blocks=1, min_total_steps=1):
    """Row tile keeping per-step bytes near target, plus megacore balancing."""
    sub = _min_sublanes(dtype)
    rows = max(1, target_block_bytes // max(1, bytes_per_row))
    rows = max(sub, (rows // sub) * sub)          # keep sublane divisibility
    if rows >= num_rows:
        rows = num_rows                           # block == full dim is legal
    # Megacore (v7x has 2 TCs): sizable tensors should span >= min_total_steps
    # grid steps, split as evenly as possible along the row axis.
    n_row_blocks = -(-num_rows // rows)
    if n_row_blocks * n_col_blocks < min_total_steps and num_rows > sub:
        needed_rb = -(-min_total_steps // max(1, n_col_blocks))
        even = -(-num_rows // needed_rb)
        even = max(sub, ((even + sub - 1) // sub) * sub)
        if even < rows:
            rows = even
    return rows


def _sigmoid_f32(b):
    # sigmoid(b) == 0.5 * tanh(0.5 * b) + 0.5: a single EUP tanh plus cheap
    # VPU mul/add, avoiding the multi-op exact f32 divide of 1/(1+exp(-b)).
    return 0.5 * jnp.tanh(0.5 * b) + 0.5


def _glu_split_kernel(a_ref, b_ref, o_ref):
    # a_ref, b_ref, o_ref: (tile_rows, col_tile) lane-aligned blocks.
    a = a_ref[...].astype(jnp.float32)
    b = b_ref[...].astype(jnp.float32)
    o_ref[...] = (a * _sigmoid_f32(b)).astype(o_ref.dtype)


def _glu_fused_kernel(x_ref, o_ref):
    # Fallback path (h not lane aligned): x_ref (tile_rows, 2h), o_ref (tile_rows, h).
    h = o_ref.shape[-1]
    x = x_ref[...]
    a = x[:, :h].astype(jnp.float32)
    b = x[:, h:].astype(jnp.float32)
    o_ref[...] = (a * _sigmoid_f32(b)).astype(o_ref.dtype)


@functools.partial(jax.jit, static_argnames=("dim",))
def glu(x, dim=-1):
    ndim = x.ndim
    d = dim % ndim
    n = x.shape[d]
    if n % 2 != 0:
        raise ValueError(f"GLU split dim {dim} has odd size {n}")

    lead = x.shape[:d]
    trail = x.shape[d + 1:]
    num_rows = 1
    for s in lead:
        num_rows *= s
    t = 1
    for s in trail:
        t *= s
    half = n // 2
    h = half * t            # half-width after folding trailing dims into lanes
    two_h = 2 * h

    x2d = x.reshape(num_rows, two_h)   # free, contiguous reshape
    itemsize = jnp.dtype(x.dtype).itemsize
    target_block_bytes, vmem_limit = _hw_config()
    min_steps = _min_total_steps(num_rows * h * itemsize)
    cost = pl.CostEstimate(flops=3 * num_rows * h,
                           transcendentals=num_rows * h,
                           bytes_accessed=3 * num_rows * h * itemsize)

    col_tile = _pick_col_tile(h)
    if col_tile is not None:
        # Fast path: two lane-aligned BlockSpecs on the same input buffer deliver
        # the a / b halves directly; the body is pure elementwise.
        n_col_blocks = h // col_tile
        tile_rows = _pick_tile_rows(num_rows, 3 * col_tile * itemsize, x.dtype,
                                    target_block_bytes, n_col_blocks, min_steps)
        grid = (pl.cdiv(num_rows, tile_rows), n_col_blocks)
        out2d = pl.pallas_call(
            _glu_split_kernel,
            out_shape=jax.ShapeDtypeStruct((num_rows, h), x.dtype),
            grid_spec=pltpu.PrefetchScalarGridSpec(
                num_scalar_prefetch=0,
                grid=grid,
                in_specs=[
                    # a-half: columns [j*col_tile, ...)
                    pl.BlockSpec((tile_rows, col_tile), lambda i, j: (i, j)),
                    # b-half: same buffer, offset by h (= n_col_blocks blocks)
                    pl.BlockSpec((tile_rows, col_tile),
                                 lambda i, j, _nb=n_col_blocks: (i, _nb + j)),
                ],
                out_specs=pl.BlockSpec((tile_rows, col_tile), lambda i, j: (i, j)),
            ),
            compiler_params=pltpu.CompilerParams(
                dimension_semantics=("parallel", "parallel"),
                vmem_limit_bytes=vmem_limit),
            cost_estimate=cost,
        )(x2d, x2d)
    else:
        # h not a multiple of 128: full-width blocks (block last dim equals the
        # full array dim, always legal) and split inside the kernel.
        # TODO(synk): for large tensors hitting this path, a manual-DMA variant
        # (memory_space=pl.ANY + lane-aligned VMEM staging of the b-half via
        # pl.ds element offsets) would avoid the cross-lane slice/masked stores.
        tile_rows = _pick_tile_rows(num_rows, 3 * h * itemsize, x.dtype,
                                    target_block_bytes, 1, min_steps)
        grid = (pl.cdiv(num_rows, tile_rows),)
        out2d = pl.pallas_call(
            _glu_fused_kernel,
            out_shape=jax.ShapeDtypeStruct((num_rows, h), x.dtype),
            grid_spec=pltpu.PrefetchScalarGridSpec(
                num_scalar_prefetch=0,
                grid=grid,
                in_specs=[pl.BlockSpec((tile_rows, two_h), lambda i: (i, 0))],
                out_specs=pl.BlockSpec((tile_rows, h), lambda i: (i, 0)),
            ),
            compiler_params=pltpu.CompilerParams(
                dimension_semantics=("parallel",),
                vmem_limit_bytes=vmem_limit),
            cost_estimate=cost,
        )(x2d)

    return out2d.reshape(lead + (half,) + trail)


if __name__ == "__main__":
    key = jax.random.PRNGKey(0)
    k1, k2, k3, k4, k5, k6 = jax.random.split(key, 6)

    def ref_glu(x, dim=-1):
        a, b = jnp.split(x, 2, axis=dim)
        return (a.astype(jnp.float32) *
                jax.nn.sigmoid(b.astype(jnp.float32))).astype(x.dtype)

    cases = [
        # (batch, seq, hidden) with lane-aligned half -> fast two-spec path
        (jax.random.normal(k1, (2, 8, 256), dtype=jnp.float32), -1, 1e-5),
        # torch docstring example: (4, 2), dim=-1 -> tiny fused path (h = 1)
        (jax.random.normal(k2, (4, 2), dtype=jnp.float32), -1, 1e-5),
        # NCHW-style tensor split on the channel dim, no transpose needed
        (jax.random.normal(k3, (2, 4, 16, 16), dtype=jnp.float32), 1, 1e-5),
        # bf16 input, small hidden -> fused path with f32 internal math
        (jax.random.normal(k4, (2, 8, 64), dtype=jnp.bfloat16), -1, 5e-2),
        # bf16 lane-aligned fast path
        (jax.random.normal(k5, (2, 16, 256), dtype=jnp.bfloat16), -1, 5e-2),
        # larger ragged-row case: exercises multi-step grid + row edge masking
        (jax.random.normal(k6, (2056, 512), dtype=jnp.float32), -1, 1e-5),
    ]

    for x, dim, tol in cases:
        out = jax.block_until_ready(glu(x, dim=dim))
        ref = ref_glu(x, dim=dim)
        exp_shape = list(x.shape)
        exp_shape[dim] //= 2
        assert out.shape == tuple(exp_shape), (out.shape, tuple(exp_shape))
        err = float(jnp.max(jnp.abs(out.astype(jnp.float32) -
                                    ref.astype(jnp.float32))))
        assert err <= tol, (x.shape, dim, err)

    print("KERNEL_OK")
</pallas_src>

<mosaic_0001>
module attributes {stable_mosaic.version = 11 : i64} {
  func.func @_glu_split_kernel(%arg0: i32, %arg1: i32, %arg2: memref<16x128xf32, #tpu.memory_space<vmem>>, %arg3: memref<16x128xf32, #tpu.memory_space<vmem>>, %arg4: memref<16x128xf32, #tpu.memory_space<vmem>>) attributes {dimension_semantics = [#tpu.dimension_semantics<parallel>, #tpu.dimension_semantics<parallel>], iteration_bounds = array<i64: 1, 1>, scalar_prefetch = 0 : i64, scratch_operands = 0 : i64, tpu.core_type = #tpu.core_type<tc>, window_params = [{transform_indices = @transform_0, window_bounds = array<i64: 16, 128>}, {transform_indices = @transform_1, window_bounds = array<i64: 16, 128>}, {transform_indices = @transform_2, window_bounds = array<i64: 16, 128>}]} {
    %c0 = arith.constant 0 : index
    %c0_0 = arith.constant 0 : index
    %0 = vector.load %arg2[%c0, %c0_0] : memref<16x128xf32, #tpu.memory_space<vmem>>, vector<16x128xf32>
    %c0_1 = arith.constant 0 : index
    %c0_2 = arith.constant 0 : index
    %1 = vector.load %arg3[%c0_1, %c0_2] : memref<16x128xf32, #tpu.memory_space<vmem>>, vector<16x128xf32>
    %cst = arith.constant 5.000000e-01 : f32
    %2 = vector.broadcast %cst : f32 to vector<16x128xf32>
    %3 = arith.mulf %2, %1 : vector<16x128xf32>
    %4 = math.tanh %3 : vector<16x128xf32>
    %cst_3 = arith.constant 5.000000e-01 : f32
    %5 = vector.broadcast %cst_3 : f32 to vector<16x128xf32>
    %6 = arith.mulf %5, %4 : vector<16x128xf32>
    %cst_4 = arith.constant 5.000000e-01 : f32
    %7 = vector.broadcast %cst_4 : f32 to vector<16x128xf32>
    %8 = arith.addf %6, %7 : vector<16x128xf32>
    %9 = arith.mulf %0, %8 : vector<16x128xf32>
    %c0_5 = arith.constant 0 : index
    %c0_6 = arith.constant 0 : index
    %10 = vector.load %arg4[%c0_5, %c0_6] : memref<16x128xf32, #tpu.memory_space<vmem>>, vector<16x128xf32>
    tpu.vector_store %arg4[%c0_5, %c0_6], %9 {strides = array<i32>} : memref<16x128xf32, #tpu.memory_space<vmem>>, vector<16x128xf32>,
    return
  }
  func.func @transform_0(%arg0: i32, %arg1: i32) -> (i32, i32) {
    %c0_i32 = arith.constant 0 : i32
    return %arg0, %arg1 : i32, i32
  }
  func.func @transform_1(%arg0: i32, %arg1: i32) -> (i32, i32) {
    %c1_i32 = arith.constant 1 : i32
    %0 = arith.addi %c1_i32, %arg1 : i32
    %c0_i32 = arith.constant 0 : i32
    return %arg0, %0 : i32, i32
  }
  func.func @transform_2(%arg0: i32, %arg1: i32) -> (i32, i32) {
    %c0_i32 = arith.constant 0 : i32
    return %arg0, %arg1 : i32, i32
  }
}

</mosaic_0001>

<llo_original>
// kernel: glu.1
$region0: #{glu.1}
  #allocation0 [shape = 'u32[]', space=smem, size = 0x4, offset = 0x4, fixed_abs, tag = 'smem constant byte address 0x4 - core index']
  #allocation1 [shape = 'u32[144,128]{1,0:T(1,128)}', space=vmem, size = 0x12000, scoped, tag = 'internal scratch']
  %s0 = inlined_call_operand.hbm [shape: f32[16,256], index: 0, kind: input, shape index: {}, may-alias: {0,1}]
  %s1 = inlined_call_operand.hbm [shape: f32[16,256], index: 1, kind: input, shape index: {}, may-alias: {0,1}]
  %s2 = inlined_call_operand.hbm [shape: f32[16,128], index: 2, kind: output, shape index: {}]
  %s3 = sld [smem:[#allocation0]]
  $region26: #{glu.1} parent=0
    _
  %s5 = ssub.s32 1, %s3
  %s6 = scalar_select 0, %s5, %s3
  $region1: #{glu.1} parent=0
    #allocation2 [shape = 'u8[8192]{0}', space=vmem, size = 0x2000, scoped, tag = 'input window, operand 0, single buffered']
    #allocation3 [shape = 's32[1]{0}', space=sflag, size = 0x4, scoped, tag = 'scoped memory for glu.1']
    #allocation4 [shape = 's32[1]{0}', space=sflag, size = 0x4, scoped, tag = 'scoped memory for glu.1']
    #allocation5 [shape = 'u8[8192]{0}', space=vmem, size = 0x2000, scoped, tag = 'input window, operand 1, single buffered']
    #allocation6 [shape = 's32[1]{0}', space=sflag, size = 0x4, scoped, tag = 'scoped memory for glu.1']
    #allocation7 [shape = 'u8[8192]{0}', space=vmem, size = 0x2000, scoped, tag = 'output window, operand 0, single buffered']
    %7 = vsyncpa [#allocation3], 0
    %8 = vsyncpa [#allocation6], 0
    %9 = vsyncpa [#allocation4], 0
    // Predicated region
    $region2: #{glu.1} parent=1 // pred_check
      _
    $region3: #{glu.1} parent=1 // pred_check_branch
      %11 = sbr.rel (0) target = $region5
    $region4: #{glu.1} parent=1 // pred_region
      %s13 = ssub.s32 256, 256
      %14 = vsyncadd [#allocation3], %s13
      %s15 = sshll.u32 [#allocation2], 4
      %s16 = int_to_ptr.vmem [resolvable:$true] %s15
      %21 = dma.hbm_to_vmem [thread:$0]  %s0, 256, %s16, [#allocation3], 256, 128, 8
    $region5: #{glu.1} parent=1 // pred_fallthru
      _
    // Predicated region
    $region6: #{glu.1} parent=1 // pred_check
      _
    $region7: #{glu.1} parent=1 // pred_check_branch
      %23 = sbr.rel (0) target = $region9
    $region8: #{glu.1} parent=1 // pred_region
      %s24 = sadd.s32 0, 1
      %s26 = ssub.s32 256, 256
      %27 = vsyncadd [#allocation6], %s26
      %s28 = smul.addr %s24, 128
      %s29 = scalar_lea.hbm %s1, %s28
      %s30 = sshll.u32 [#allocation5], 4
      %s31 = int_to_ptr.vmem [resolvable:$true] %s30
      %36 = dma.hbm_to_vmem [thread:$0]  %s29, 256, %s31, [#allocation6], 256, 128, 8
    $region9: #{glu.1} parent=1 // pred_fallthru
      _
    // Predicated region
    $region10: #{glu.1} parent=1 // pred_check
      _
    $region11: #{glu.1} parent=1 // pred_check_branch
      %38 = sbr.rel (0) target = $region13
    $region12: #{glu.1} parent=1 // pred_region
      %39 = dma.done [#allocation3], 256
    $region13: #{glu.1} parent=1 // pred_fallthru
      _
    // Predicated region
    $region14: #{glu.1} parent=1 // pred_check
      _
    $region15: #{glu.1} parent=1 // pred_check_branch
      %41 = sbr.rel (0) target = $region17
    $region16: #{glu.1} parent=1 // pred_region
      %42 = dma.done [#allocation6], 256
    $region17: #{glu.1} parent=1 // pred_fallthru
      _
    %s43 = sadd.s32 0, 1
    %v44 = vld [vmem:[#allocation2] sm:$0xff]
    %v45 = vld [vmem:[#allocation2 + $0x8] sm:$0xff]
    %v46 = vld [vmem:[#allocation5] sm:$0xff]
    %v47 = vld [vmem:[#allocation5 + $0x8] sm:$0xff]
    %v48 = vmul.f32 %v46, 0.5
    %v49 = vmul.f32 %v47, 0.5
    %v50 = vtanh.pop %v48
    %v51 = vtanh.pop %v49
    %v52 = vmul.f32 %v50, 0.5
    %v53 = vmul.f32 %v51, 0.5
    %v54 = vadd.f32 %v52, 0.5
    %v55 = vadd.f32 %v53, 0.5
    %v56 = vmul.f32 %v44, %v54
    %v57 = vmul.f32 %v45, %v55
    %58 = vst [vmem:[#allocation7] sm:$0xff] %v56
    %59 = vst [vmem:[#allocation7 + $0x8] sm:$0xff] %v57
    // Predicated region
    $region18: #{glu.1} parent=1 // pred_check
      _
    $region19: #{glu.1} parent=1 // pred_check_branch
      %61 = sbr.rel (0) target = $region21
    $region20: #{glu.1} parent=1 // pred_region
      %s63 = ssub.s32 256, 256
      %64 = vsyncadd [#allocation4], %s63
      %s65 = sshll.u32 [#allocation7], 4
      %s66 = int_to_ptr.vmem [resolvable:$true] %s65
      %71 = dma.vmem_to_hbm [thread:$0]  %s66, 256, %s2, [#allocation4], 128, 128, 8
    $region21: #{glu.1} parent=1 // pred_fallthru
      _
    // Predicated region
    $region22: #{glu.1} parent=1 // pred_check
      _
    $region23: #{glu.1} parent=1 // pred_check_branch
      %73 = sbr.rel (0) target = $region25
    $region24: #{glu.1} parent=1 // pred_region
      %74 = dma.done [#allocation4], 256
    $region25: #{glu.1} parent=1 // pred_fallthru
      _
    %75 = vsyncpa [#allocation3], 1
    %76 = vsyncpa [#allocation6], 1
    %77 = vsyncpa [#allocation4], 1

</llo_original>
